<compile_context>
chip_gen: v7x
topology: tpu7x:2x2x1
jax: 0.10.0
libtpu: 0.0.40
codegen_flags: <defaults>
</compile_context>

<pallas_src>
import functools

import jax
import jax.numpy as jnp
from jax import lax
from jax.experimental import pallas as pl
from jax.experimental.pallas import tpu as pltpu

GAMMA = 2.0            # module hyperparameter (baked at trace time)
BLOCK_COLS = 1024      # lane-dense last dim (multiple of 128)
MAX_BLOCK_ROWS = 512   # up to 512x1024 f32 = 2 MiB per input block
NUM_PARALLEL = 2       # split reduction across 2 TCs on v7x; no-op cost on 1-TC chips


def _cdiv(a, b):
    return -(-a // b)


def _round_up(a, m):
    return _cdiv(a, m) * m


def _focal_loss_kernel(x_ref, t_ref, o_ref, *, gamma, total, block_rows,
                       block_cols, blocks_per_core):
    p = pl.program_id(0)   # parallel slice (TensorCore on v7x)
    b = pl.program_id(1)   # row-block within the slice (reduction axis)

    @pl.when(b == 0)
    def _():
        o_ref[...] = jnp.zeros_like(o_ref)

    x = x_ref[...].astype(jnp.float32)
    t = t_ref[...].astype(jnp.float32)

    # Stable BCE-with-logits: x - x*t + max(-x,0) + log(exp(-max)+exp(-x-max))
    #                       == max(x,0) - x*t + log1p(exp(-|x|))   (2 EUP ops)
    bce = jnp.maximum(x, 0.0) - x * t + jnp.log1p(jnp.exp(-jnp.abs(x)))

    # Modulating factor exp(gamma * logsigmoid(z)), z = -x*(2t-1) = x*(1-2t)
    z = x * (1.0 - 2.0 * t)
    if gamma == 2.0:
        # sigmoid(z)**2 : one exp + one divide instead of exp+log1p+exp
        s = 1.0 / (1.0 + jnp.exp(-z))
        factor = s * s
    else:
        logsig = jnp.minimum(z, 0.0) - jnp.log1p(jnp.exp(-jnp.abs(z)))
        factor = jnp.exp(jnp.float32(gamma) * logsig)

    loss = factor * bce

    # Mask out padded tail elements (flattened index >= total).
    # TODO(synk): global index is int32; switch to a split high/low index for
    # tensors with more than 2**31 elements.
    block_idx = p * blocks_per_core + b
    row = lax.broadcasted_iota(jnp.int32, (block_rows, block_cols), 0)
    col = lax.broadcasted_iota(jnp.int32, (block_rows, block_cols), 1)
    gidx = (block_idx * block_rows + row) * block_cols + col
    loss = jnp.where(gidx < total, loss, 0.0)

    # Layout-preserving partial reduce: fold sublane row-groups onto
    # (8, block_cols) with pure VPU adds; accumulate into the resident
    # per-slice output block.
    partial = jnp.sum(loss.reshape(block_rows // 8, 8, block_cols), axis=0)
    o_ref[...] += partial[None]


def focal_loss(input_, target, gamma=GAMMA):
    if input_.shape != target.shape:
        raise ValueError(
            "Target size ({}) must be the same as input size ({})".format(
                target.shape, input_.shape))

    total = int(input_.size)
    flat_x = input_.reshape(-1)
    flat_t = target.reshape(-1)

    # Tiling: pad the flat tensor to NUM_PARALLEL * blocks_per_core row-blocks
    # of (block_rows, BLOCK_COLS).
    rows_needed = max(1, _cdiv(total, BLOCK_COLS))
    rows_per_core = _cdiv(rows_needed, NUM_PARALLEL)
    block_rows = min(MAX_BLOCK_ROWS, _round_up(rows_per_core, 8))
    blocks_per_core = _cdiv(rows_per_core, block_rows)
    rows_per_core = blocks_per_core * block_rows
    padded_rows = NUM_PARALLEL * rows_per_core
    padded_total = padded_rows * BLOCK_COLS

    pad = padded_total - total
    if pad:
        flat_x = jnp.pad(flat_x, (0, pad))
        flat_t = jnp.pad(flat_t, (0, pad))
    x2d = flat_x.reshape(padded_rows, BLOCK_COLS)
    t2d = flat_t.reshape(padded_rows, BLOCK_COLS)

    kernel = functools.partial(
        _focal_loss_kernel,
        gamma=float(gamma),
        total=total,
        block_rows=block_rows,
        block_cols=BLOCK_COLS,
        blocks_per_core=blocks_per_core,
    )

    in_spec = pl.BlockSpec(
        (block_rows, BLOCK_COLS),
        lambda p, b: (p * blocks_per_core + b, 0),
    )

    partials = pl.pallas_call(
        kernel,
        out_shape=jax.ShapeDtypeStruct((NUM_PARALLEL, 8, BLOCK_COLS), jnp.float32),
        grid_spec=pltpu.PrefetchScalarGridSpec(
            num_scalar_prefetch=0,
            grid=(NUM_PARALLEL, blocks_per_core),
            in_specs=[in_spec, in_spec],
            out_specs=pl.BlockSpec((1, 8, BLOCK_COLS), lambda p, b: (p, 0, 0)),
        ),
        compiler_params=pltpu.CompilerParams(
            dimension_semantics=("parallel", "arbitrary"),
            vmem_limit_bytes=32 * 1024 * 1024,
        ),
    )(x2d, t2d)

    # Tiny final reduce + mean in plain JAX.
    return jnp.sum(partials) / jnp.float32(total)


def _focal_loss_ref(x, t, gamma=GAMMA):
    # Exact transcription of the PyTorch module.
    x = x.astype(jnp.float32)
    t = t.astype(jnp.float32)
    max_val = jnp.maximum(-x, 0.0)
    loss = x - x * t + max_val + jnp.log(jnp.exp(-max_val) + jnp.exp(-x - max_val))
    invprobs = jax.nn.log_sigmoid(-x * (t * 2.0 - 1.0))
    loss = jnp.exp(invprobs * gamma) * loss
    return jnp.mean(loss)


if __name__ == "__main__":
    key = jax.random.PRNGKey(0)
    k1, k2, k3, k4 = jax.random.split(key, 4)

    # NCHW logits and binary targets (2, 4, 16, 16).
    x = jax.random.normal(k1, (2, 4, 16, 16), dtype=jnp.float32)
    t = (jax.random.uniform(k2, (2, 4, 16, 16)) > 0.5).astype(jnp.float32)

    out = focal_loss(x, t, gamma=GAMMA)
    jax.block_until_ready(out)
    ref = _focal_loss_ref(x, t, GAMMA)
    assert jnp.allclose(out, ref, rtol=1e-4, atol=1e-6), (out, ref)

    # Odd element count (exercises the masked / padded-tail path).
    x2 = jax.random.normal(k3, (3, 5, 11, 13), dtype=jnp.float32)
    t2 = (jax.random.uniform(k4, (3, 5, 11, 13)) > 0.5).astype(jnp.float32)
    out2 = focal_loss(x2, t2, gamma=GAMMA)
    jax.block_until_ready(out2)
    ref2 = _focal_loss_ref(x2, t2, GAMMA)
    assert jnp.allclose(out2, ref2, rtol=1e-4, atol=1e-6), (out2, ref2)

    print("KERNEL_OK")
</pallas_src>

<mosaic_0001>
module attributes {stable_mosaic.version = 11 : i64} {
  func.func @_focal_loss_kernel(%arg0: i32, %arg1: i32, %arg2: memref<8x1024xf32, #tpu.memory_space<vmem>>, %arg3: memref<8x1024xf32, #tpu.memory_space<vmem>>, %arg4: memref<1x8x1024xf32, #tpu.memory_space<vmem>>) attributes {dimension_semantics = [#tpu.dimension_semantics<parallel>, #tpu.dimension_semantics<arbitrary>], iteration_bounds = array<i64: 2, 1>, scalar_prefetch = 0 : i64, scratch_operands = 0 : i64, tpu.core_type = #tpu.core_type<tc>, window_params = [{transform_indices = @transform_0, window_bounds = array<i64: 8, 1024>}, {transform_indices = @transform_1, window_bounds = array<i64: 8, 1024>}, {transform_indices = @transform_2, window_bounds = array<i64: 1, 8, 1024>}]} {
    %c0_i32 = arith.constant 0 : i32
    %0 = arith.cmpi eq, %arg1, %c0_i32 : i32
    %1 = arith.extui %0 : i1 to i32
    %c0_i32_0 = arith.constant 0 : i32
    %2 = arith.cmpi ne, %1, %c0_i32_0 : i32
    scf.if %2 {
      %cst_18 = arith.constant 0.000000e+00 : f32
      %49 = vector.broadcast %cst_18 : f32 to vector<1x8x1024xf32>
      %c0_19 = arith.constant 0 : index
      %c0_20 = arith.constant 0 : index
      %c0_21 = arith.constant 0 : index
      %50 = vector.load %arg4[%c0_19, %c0_20, %c0_21] : memref<1x8x1024xf32, #tpu.memory_space<vmem>>, vector<1x8x1024xf32>
      tpu.vector_store %arg4[%c0_19, %c0_20, %c0_21], %49 {strides = array<i32>} : memref<1x8x1024xf32, #tpu.memory_space<vmem>>, vector<1x8x1024xf32>,
    } else {
    }
    %c0 = arith.constant 0 : index
    %c0_1 = arith.constant 0 : index
    %3 = vector.load %arg2[%c0, %c0_1] : memref<8x1024xf32, #tpu.memory_space<vmem>>, vector<8x1024xf32>
    %c0_2 = arith.constant 0 : index
    %c0_3 = arith.constant 0 : index
    %4 = vector.load %arg3[%c0_2, %c0_3] : memref<8x1024xf32, #tpu.memory_space<vmem>>, vector<8x1024xf32>
    %cst = arith.constant 0.000000e+00 : f32
    %5 = vector.broadcast %cst : f32 to vector<8x1024xf32>
    %6 = arith.maximumf %3, %5 : vector<8x1024xf32>
    %7 = arith.mulf %3, %4 : vector<8x1024xf32>
    %8 = arith.subf %6, %7 : vector<8x1024xf32>
    %9 = math.absf %3 : vector<8x1024xf32>
    %cst_4 = arith.constant 0.000000e+00 : f32
    %10 = vector.broadcast %cst_4 : f32 to vector<8x1024xf32>
    %11 = arith.subf %10, %9 : vector<8x1024xf32>
    %12 = math.exp %11 : vector<8x1024xf32>
    %13 = math.log1p %12 : vector<8x1024xf32>
    %14 = arith.addf %8, %13 : vector<8x1024xf32>
    %cst_5 = arith.constant 2.000000e+00 : f32
    %15 = vector.broadcast %cst_5 : f32 to vector<8x1024xf32>
    %16 = arith.mulf %15, %4 : vector<8x1024xf32>
    %cst_6 = arith.constant 1.000000e+00 : f32
    %17 = vector.broadcast %cst_6 : f32 to vector<8x1024xf32>
    %18 = arith.subf %17, %16 : vector<8x1024xf32>
    %19 = arith.mulf %3, %18 : vector<8x1024xf32>
    %cst_7 = arith.constant 0.000000e+00 : f32
    %20 = vector.broadcast %cst_7 : f32 to vector<8x1024xf32>
    %21 = arith.subf %20, %19 : vector<8x1024xf32>
    %22 = math.exp %21 : vector<8x1024xf32>
    %cst_8 = arith.constant 1.000000e+00 : f32
    %23 = vector.broadcast %cst_8 : f32 to vector<8x1024xf32>
    %24 = arith.addf %23, %22 : vector<8x1024xf32>
    %cst_9 = arith.constant 1.000000e+00 : f32
    %25 = vector.broadcast %cst_9 : f32 to vector<8x1024xf32>
    %26 = arith.divf %25, %24 : vector<8x1024xf32>
    %27 = arith.mulf %26, %26 : vector<8x1024xf32>
    %28 = arith.mulf %27, %14 : vector<8x1024xf32>
    %c1_i32 = arith.constant 1 : i32
    %29 = arith.muli %arg0, %c1_i32 : i32
    %30 = arith.addi %29, %arg1 : i32
    %31 = tpu.iota {dimensions = array<i32: 0>} : vector<8x1024xi32>
    %32 = tpu.iota {dimensions = array<i32: 1>} : vector<8x1024xi32>
    %c8_i32 = arith.constant 8 : i32
    %33 = arith.muli %30, %c8_i32 : i32
    %34 = vector.broadcast %33 : i32 to vector<8x1024xi32>
    %35 = arith.addi %34, %31 : vector<8x1024xi32>
    %c1024_i32 = arith.constant 1024 : i32
    %36 = vector.broadcast %c1024_i32 : i32 to vector<8x1024xi32>
    %37 = arith.muli %35, %36 : vector<8x1024xi32>
    %38 = arith.addi %37, %32 : vector<8x1024xi32>
    %c2048_i32 = arith.constant 2048 : i32
    %39 = vector.broadcast %c2048_i32 : i32 to vector<8x1024xi32>
    %40 = arith.cmpi slt, %38, %39 : vector<8x1024xi32>
    %cst_10 = arith.constant 0.000000e+00 : f32
    %41 = vector.broadcast %cst_10 : f32 to vector<8x1024xf32>
    %42 = arith.select %40, %28, %41 : vector<8x1024xi1>, vector<8x1024xf32>
    %43 = vector.shape_cast %42 : vector<8x1024xf32> to vector<1x8x1024xf32>
    %cst_11 = arith.constant dense<0.000000e+00> : vector<8x1024xf32>
    %44 = vector.multi_reduction <add>, %43, %cst_11 [0] : vector<1x8x1024xf32> to vector<8x1024xf32>
    %c0_12 = arith.constant 0 : index
    %c0_13 = arith.constant 0 : index
    %c0_14 = arith.constant 0 : index
    %45 = vector.load %arg4[%c0_12, %c0_13, %c0_14] : memref<1x8x1024xf32, #tpu.memory_space<vmem>>, vector<1x8x1024xf32>
    %46 = vector.shape_cast %44 : vector<8x1024xf32> to vector<1x8x1024xf32>
    %47 = arith.addf %45, %46 : vector<1x8x1024xf32>
    %c0_15 = arith.constant 0 : index
    %c0_16 = arith.constant 0 : index
    %c0_17 = arith.constant 0 : index
    %48 = vector.load %arg4[%c0_15, %c0_16, %c0_17] : memref<1x8x1024xf32, #tpu.memory_space<vmem>>, vector<1x8x1024xf32>
    tpu.vector_store %arg4[%c0_15, %c0_16, %c0_17], %47 {strides = array<i32>} : memref<1x8x1024xf32, #tpu.memory_space<vmem>>, vector<1x8x1024xf32>,
    return
  }
  func.func @transform_0(%arg0: i32, %arg1: i32) -> (i32, i32) {
    %c1_i32 = arith.constant 1 : i32
    %0 = arith.muli %arg0, %c1_i32 : i32
    %1 = arith.addi %0, %arg1 : i32
    %c0_i32 = arith.constant 0 : i32
    %c0_i32_0 = arith.constant 0 : i32
    return %1, %c0_i32 : i32, i32
  }
  func.func @transform_1(%arg0: i32, %arg1: i32) -> (i32, i32) {
    %c1_i32 = arith.constant 1 : i32
    %0 = arith.muli %arg0, %c1_i32 : i32
    %1 = arith.addi %0, %arg1 : i32
    %c0_i32 = arith.constant 0 : i32
    %c0_i32_0 = arith.constant 0 : i32
    return %1, %c0_i32 : i32, i32
  }
  func.func @transform_2(%arg0: i32, %arg1: i32) -> (i32, i32, i32) {
    %c0_i32 = arith.constant 0 : i32
    %c0_i32_0 = arith.constant 0 : i32
    %c0_i32_1 = arith.constant 0 : i32
    return %arg0, %c0_i32, %c0_i32_0 : i32, i32, i32
  }
}

</mosaic_0001>

<llo_original>
// kernel: tpu_custom_call.1
$region0: #{tpu_custom_call.1}
  #allocation0 [shape = 'u32[]', space=smem, size = 0x4, offset = 0x4, fixed_abs, tag = 'smem constant byte address 0x4 - core index']
  #allocation1 [shape = 'u32[144,128]{1,0:T(1,128)}', space=vmem, size = 0x12000, scoped, tag = 'internal scratch']
  %s0 = inlined_call_operand.hbm [shape: f32[16,1024], index: 0, kind: input, shape index: {}]
  %s1 = inlined_call_operand.hbm [shape: f32[16,1024], index: 1, kind: input, shape index: {}]
  %s2 = inlined_call_operand.hbm [shape: f32[2,8,1024], index: 2, kind: output, shape index: {}]
  %s3 = sld [smem:[#allocation0]]
  $region53: #{tpu_custom_call.1} parent=0
    _
  %s5 = ssub.s32 1, %s3
  %s6 = scalar_select 0, %s5, %s3
  $region1: #{tpu_custom_call.1} parent=0
    #allocation2 [shape = 'u8[65536]{0}', space=vmem, size = 0x10000, scoped, tag = 'input window, operand 0']
    #allocation3 [shape = 's32[2]{0}', space=sflag, size = 0x8, scoped, tag = 'scoped memory for tpu_custom_call.1']
    #allocation4 [shape = 's32[2]{0}', space=sflag, size = 0x8, scoped, tag = 'scoped memory for tpu_custom_call.1']
    #allocation5 [shape = 'u8[65536]{0}', space=vmem, size = 0x10000, scoped, tag = 'input window, operand 1']
    #allocation6 [shape = 's32[2]{0}', space=sflag, size = 0x8, scoped, tag = 'scoped memory for tpu_custom_call.1']
    #allocation7 [shape = 'u8[65536]{0}', space=vmem, size = 0x10000, scoped, tag = 'output window, operand 0']
    %7 = vsyncpa [#allocation3], 0
    %s8 = scalar_lea.sflag [#allocation3], 1
    %9 = vsyncpa %s8, 0
    %10 = vsyncpa [#allocation6], 0
    %s11 = scalar_lea.sflag [#allocation6], 1
    %12 = vsyncpa %s11, 0
    %13 = vsyncpa [#allocation4], 0
    %s14 = scalar_lea.sflag [#allocation4], 1
    %15 = vsyncpa %s14, 0
    loop: start=0, step=1, limit=4
    $region2: #{tpu_custom_call.1} parent=1 // loop_pre_header
      _
    $region3: #{tpu_custom_call.1} parent=1 // loop_header
      %s17 = sphi 0, %s21
      %p18 = scmp.ge.s32.totalorder %s17, 4
      %s24 = sphi 0, %s36
      %s25 = sphi 0, %s32
      %s26 = sphi 0, %s24
      %s27 = sphi 0, %s25
      %s28 = sphi 0, %s26
      %s29 = sphi 0, %s27
      %s41 = sphi 0, %s43
      %s44 = sphi 0, %s41
      %s45 = sphi 0, %s44
      %s61 = sphi 0, %s45
      %s69 = sphi 0, %s71
      %s72 = sphi 0, %s69
      %s73 = sphi 0, %s72
      %s89 = sphi 0, %s73
      %s95 = sphi 0, %s97
      %s98 = sphi 0, %s95
      %s99 = sphi 0, %s98
      %s115 = sphi 0, %s99
    $region4: #{tpu_custom_call.1} parent=1 // loop_header_branch
      %20 = sbr.rel (%p18) target = $region8
    $region5: #{tpu_custom_call.1} parent=1 // loop_body
      %s22 = ssub.s32 %s17, 1
      %s23 = ssub.s32 %s17, 2
      %s30 = sadd.s32 1, %s25
      %p31 = scmp.ge.s32.totalorder %s30, 1
      %s32 = scalar_select %p31, 0, %s30
      %s33 = sadd.s32 1, %s24
      %s34 = scalar_select %p31, %s33, %s24
      %p35 = scmp.ge.s32.totalorder %s34, 2
      %s36 = scalar_select %p35, 0, %s34
      %s37 = sadd.s32 %s24, %s25
      %s38 = sadd.s32 %s36, %s32
      %s39 = ssub.s32 %s37, %s38
      %p40 = scmp.eq.s32.totalorder %s39, 0
      %s42 = sadd.s32 %s41, 1
      %s43 = scalar_select %p40, %s41, %s42
      %p46 = pneg %p40
      %p47 = scmp.eq.s32.totalorder %s17, 1
      %p48 = por %p46, %p47
      %p49 = scmp.ne.s32.totalorder %s41, %s44
      %p50 = scmp.eq.s32.totalorder %s17, 0
      %p51 = por %p49, %p50
      %p52 = scmp.ne.s32.totalorder %s41, %s44
      %p53 = scmp.eq.s32.totalorder %s22, 1
      %p54 = por %p52, %p53
      %p55 = scmp.ne.s32.totalorder %s44, %s45
      %p56 = scmp.eq.s32.totalorder %s22, 0
      %p57 = por %p55, %p56
      %p58 = scmp.ne.s32.totalorder %s44, %s45
      %p59 = scmp.eq.s32.totalorder %s23, 1
      %p60 = por %p58, %p59
      %p62 = scmp.ne.s32.totalorder %s45, %s61
      %p63 = scmp.eq.s32.totalorder %s23, 0
      %p64 = por %p62, %p63
      %s65 = sadd.s32 %s24, %s25
      %s66 = sadd.s32 %s36, %s32
      %s67 = ssub.s32 %s65, %s66
      %p68 = scmp.eq.s32.totalorder %s67, 0
      %s70 = sadd.s32 %s69, 1
      %s71 = scalar_select %p68, %s69, %s70
      %p74 = pneg %p68
      %p75 = scmp.eq.s32.totalorder %s17, 1
      %p76 = por %p74, %p75
      %p77 = scmp.ne.s32.totalorder %s69, %s72
      %p78 = scmp.eq.s32.totalorder %s17, 0
      %p79 = por %p77, %p78
      %p80 = scmp.ne.s32.totalorder %s69, %s72
      %p81 = scmp.eq.s32.totalorder %s22, 1
      %p82 = por %p80, %p81
      %p83 = scmp.ne.s32.totalorder %s72, %s73
      %p84 = scmp.eq.s32.totalorder %s22, 0
      %p85 = por %p83, %p84
      %p86 = scmp.ne.s32.totalorder %s72, %s73
      %p87 = scmp.eq.s32.totalorder %s23, 1
      %p88 = por %p86, %p87
      %p90 = scmp.ne.s32.totalorder %s73, %s89
      %p91 = scmp.eq.s32.totalorder %s23, 0
      %p92 = por %p90, %p91
      %s93 = ssub.s32 %s24, %s36
      %p94 = scmp.eq.s32.totalorder %s93, 0
      %s96 = sadd.s32 %s95, 1
      %s97 = scalar_select %p94, %s95, %s96
      %p100 = pneg %p94
      %p101 = scmp.eq.s32.totalorder %s17, 1
      %p102 = por %p100, %p101
      %p103 = scmp.ne.s32.totalorder %s95, %s98
      %p104 = scmp.eq.s32.totalorder %s17, 0
      %p105 = por %p103, %p104
      %p106 = scmp.ne.s32.totalorder %s95, %s98
      %p107 = scmp.eq.s32.totalorder %s22, 1
      %p108 = por %p106, %p107
      %p109 = scmp.ne.s32.totalorder %s98, %s99
      %p110 = scmp.eq.s32.totalorder %s22, 0
      %p111 = por %p109, %p110
      %p112 = scmp.ne.s32.totalorder %s98, %s99
      %p113 = scmp.eq.s32.totalorder %s23, 1
      %p114 = por %p112, %p113
      %p116 = scmp.ne.s32.totalorder %s99, %s115
      %p117 = scmp.eq.s32.totalorder %s23, 0
      %p118 = por %p116, %p117
      %p119 = scmp.le.s32.totalorder 1, %s17
      %p120 = scmp.lt.s32.totalorder %s17, 3
      %p121 = pnand %p119, %p120
      %p122 = pneg %p121
      // Predicated region
      $region9: #{tpu_custom_call.1} parent=5 // pred_check
        _
      $region10: #{tpu_custom_call.1} parent=5 // pred_check_branch
        %124 = sbr.rel (%p121) target = $region12
      $region11: #{tpu_custom_call.1} parent=5 // pred_region
        %s125 = ssub.s32 %s17, 1
      $region12: #{tpu_custom_call.1} parent=5 // pred_fallthru
        _
      %p126 = scmp.lt.s32.totalorder %s17, 2
      // Predicated region
      $region13: #{tpu_custom_call.1} parent=5 // pred_check
        %p127 = pneg %p126
      $region14: #{tpu_custom_call.1} parent=5 // pred_check_branch
        %129 = sbr.rel (%p127) target = $region16
      $region15: #{tpu_custom_call.1} parent=5 // pred_region
        // Predicated region
        $region17: #{tpu_custom_call.1} parent=15 // pred_check
          %p130 = pneg %p51
        $region18: #{tpu_custom_call.1} parent=15 // pred_check_branch
          %132 = sbr.rel (%p130) target = $region20
        $region19: #{tpu_custom_call.1} parent=15 // pred_region
          %s133 = sand.u32 %s41, 1
          %s134 = scalar_lea.sflag [#allocation3], %s133
          %s135 = sand.u32 %s41, 1
          %s136 = smul.addr %s135, 64
          %s137 = scalar_lea.vmem [#allocation2], %s136
          %s138 = sadd.s32 %s24, %s25
          %s140 = ssub.s32 1024, 1024
          %141 = vsyncadd %s134, %s140
          %s142 = smul.addr %s138, 8
          %s143 = smul.addr %s142, 128
          %s144 = scalar_lea.hbm %s0, %s143
          %s146 = sshll.u32 %s137, 4
          %s147 = int_to_ptr.vmem [resolvable:$true] %s146
          %149 = dma.hbm_to_vmem [thread:$0]  %s144, 1024, %s147, %s134
        $region20: #{tpu_custom_call.1} parent=15 // pred_fallthru
          _
        // Predicated region
        $region21: #{tpu_custom_call.1} parent=15 // pred_check
          %p150 = pneg %p79
        $region22: #{tpu_custom_call.1} parent=15 // pred_check_branch
          %152 = sbr.rel (%p150) target = $region24
        $region23: #{tpu_custom_call.1} parent=15 // pred_region
          %s153 = sand.u32 %s69, 1
          %s154 = scalar_lea.sflag [#allocation6], %s153
          %s155 = sand.u32 %s69, 1
          %s156 = smul.addr %s155, 64
          %s157 = scalar_lea.vmem [#allocation5], %s156
          %s158 = sadd.s32 %s24, %s25
          %s160 = ssub.s32 1024, 1024
          %161 = vsyncadd %s154, %s160
          %s162 = smul.addr %s158, 8
          %s163 = smul.addr %s162, 128
          %s164 = scalar_lea.hbm %s1, %s163
          %s166 = sshll.u32 %s157, 4
          %s167 = int_to_ptr.vmem [resolvable:$true] %s166
          %169 = dma.hbm_to_vmem [thread:$0]  %s164, 1024, %s167, %s154
        $region24: #{tpu_custom_call.1} parent=15 // pred_fallthru
          _
      $region16: #{tpu_custom_call.1} parent=5 // pred_fallthru
        _
      %p170 = scmp.le.s32.totalorder 1, %s17
      %p171 = scmp.lt.s32.totalorder %s17, 3
      %p172 = pnand %p170, %p171
      %p173 = pneg %p172
      // Predicated region
      $region25: #{tpu_custom_call.1} parent=5 // pred_check
        _
      $region26: #{tpu_custom_call.1} parent=5 // pred_check_branch
        %175 = sbr.rel (%p172) target = $region28
      $region27: #{tpu_custom_call.1} parent=5 // pred_region
        %s176 = ssub.s32 %s17, 1
        %s177 = sand.u32 %s44, 1
        %s178 = scalar_lea.sflag [#allocation3], %s177
        %s179 = sand.u32 %s44, 1
        %s180 = smul.addr %s179, 64
        %s181 = scalar_lea.vmem [#allocation2], %s180
        // Predicated region
        $region29: #{tpu_custom_call.1} parent=27 // pred_check
          %p182 = pneg %p57
        $region30: #{tpu_custom_call.1} parent=27 // pred_check_branch
          %184 = sbr.rel (%p182) target = $region32
        $region31: #{tpu_custom_call.1} parent=27 // pred_region
          %185 = dma.done %s178, 1024
        $region32: #{tpu_custom_call.1} parent=27 // pred_fallthru
          _
        %s186 = sand.u32 %s72, 1
        %s187 = scalar_lea.sflag [#allocation6], %s186
        %s188 = sand.u32 %s72, 1
        %s189 = smul.addr %s188, 64
        %s190 = scalar_lea.vmem [#allocation5], %s189
        // Predicated region
        $region33: #{tpu_custom_call.1} parent=27 // pred_check
          %p191 = pneg %p85
        $region34: #{tpu_custom_call.1} parent=27 // pred_check_branch
          %193 = sbr.rel (%p191) target = $region36
        $region35: #{tpu_custom_call.1} parent=27 // pred_region
          %194 = dma.done %s187, 1024
        $region36: #{tpu_custom_call.1} parent=27 // pred_fallthru
          _
        %s195 = sand.u32 %s44, 1
        %s196 = scalar_lea.sflag [#allocation3], %s195
        %s197 = sand.u32 %s44, 1
        %s198 = smul.addr %s197, 64
        %s199 = scalar_lea.vmem [#allocation2], %s198
        %p200 = pneg %p57
        %p201 = pneg %p54
        %s202 = sand.u32 %s72, 1
        %s203 = scalar_lea.sflag [#allocation6], %s202
        %s204 = sand.u32 %s72, 1
        %s205 = smul.addr %s204, 64
        %s206 = scalar_lea.vmem [#allocation5], %s205
        %p207 = pneg %p85
        %p208 = pneg %p82
        %p209 = pneg %p111
        %p210 = pneg %p108
        %s211 = sand.u32 %s98, 1
        %s212 = scalar_lea.sflag [#allocation4], %s211
        %s213 = sand.u32 %s98, 1
        %s214 = smul.addr %s213, 64
        %s215 = scalar_lea.vmem [#allocation7], %s214
        %s216 = sadd.s32 %s26, %s27
        %s217 = sadd.s32 %s26, %s27
        %p218 = scmp.eq.s32.totalorder %s27, 0
        // Predicated region
        $region37: #{tpu_custom_call.1} parent=27 // pred_check
          %p219 = pneg %p218
        $region38: #{tpu_custom_call.1} parent=27 // pred_check_branch
          %221 = sbr.rel (%p219) target = $region40
        $region39: #{tpu_custom_call.1} parent=27 // pred_region
          %222 = vst [vmem:[%s215] sm:$0xff] 0.0
          %223 = vst [vmem:[%s215 + $0x8] sm:$0xff] 0.0
          %224 = vst [vmem:[%s215 + $0x10] sm:$0xff] 0.0
          %225 = vst [vmem:[%s215 + $0x18] sm:$0xff] 0.0
          %226 = vst [vmem:[%s215 + $0x20] sm:$0xff] 0.0
          %227 = vst [vmem:[%s215 + $0x28] sm:$0xff] 0.0
          %228 = vst [vmem:[%s215 + $0x30] sm:$0xff] 0.0
          %229 = vst [vmem:[%s215 + $0x38] sm:$0xff] 0.0
        $region40: #{tpu_custom_call.1} parent=27 // pred_fallthru
          _
        %v230 = vld [vmem:[%s181] sm:$0xff]
        %v231 = vld [vmem:[%s181 + $0x8] sm:$0xff]
        %v232 = vld [vmem:[%s181 + $0x10] sm:$0xff]
        %v233 = vld [vmem:[%s181 + $0x18] sm:$0xff]
        %v234 = vld [vmem:[%s181 + $0x20] sm:$0xff]
        %v235 = vld [vmem:[%s181 + $0x28] sm:$0xff]
        %v236 = vld [vmem:[%s181 + $0x30] sm:$0xff]
        %v237 = vld [vmem:[%s181 + $0x38] sm:$0xff]
        %v238 = vld [vmem:[%s190] sm:$0xff]
        %v239 = vld [vmem:[%s190 + $0x8] sm:$0xff]
        %v240 = vld [vmem:[%s190 + $0x10] sm:$0xff]
        %v241 = vld [vmem:[%s190 + $0x18] sm:$0xff]
        %v242 = vld [vmem:[%s190 + $0x20] sm:$0xff]
        %v243 = vld [vmem:[%s190 + $0x28] sm:$0xff]
        %v244 = vld [vmem:[%s190 + $0x30] sm:$0xff]
        %v245 = vld [vmem:[%s190 + $0x38] sm:$0xff]
        %v246 = vmax.f32 %v230, 0.0
        %v247 = vmax.f32 %v231, 0.0
        %v248 = vmax.f32 %v232, 0.0
        %v249 = vmax.f32 %v233, 0.0
        %v250 = vmax.f32 %v234, 0.0
        %v251 = vmax.f32 %v235, 0.0
        %v252 = vmax.f32 %v236, 0.0
        %v253 = vmax.f32 %v237, 0.0
        %v254 = vmul.f32 %v230, %v238
        %v255 = vmul.f32 %v231, %v239
        %v256 = vmul.f32 %v232, %v240
        %v257 = vmul.f32 %v233, %v241
        %v258 = vmul.f32 %v234, %v242
        %v259 = vmul.f32 %v235, %v243
        %v260 = vmul.f32 %v236, %v244
        %v261 = vmul.f32 %v237, %v245
        %v262 = vsub.f32 %v246, %v254
        %v263 = vsub.f32 %v247, %v255
        %v264 = vsub.f32 %v248, %v256
        %v265 = vsub.f32 %v249, %v257
        %v266 = vsub.f32 %v250, %v258
        %v267 = vsub.f32 %v251, %v259
        %v268 = vsub.f32 %v252, %v260
        %v269 = vsub.f32 %v253, %v261
        %v270 = vand.u32 2147483647, %v230
        %v271 = vand.u32 2147483647, %v231
        %v272 = vand.u32 2147483647, %v232
        %v273 = vand.u32 2147483647, %v233
        %v274 = vand.u32 2147483647, %v234
        %v275 = vand.u32 2147483647, %v235
        %v276 = vand.u32 2147483647, %v236
        %v277 = vand.u32 2147483647, %v237
        %v278 = vsub.f32 0.0, %v270
        %v279 = vsub.f32 0.0, %v271
        %v280 = vsub.f32 0.0, %v272
        %v281 = vsub.f32 0.0, %v273
        %v282 = vsub.f32 0.0, %v274
        %v283 = vsub.f32 0.0, %v275
        %v284 = vsub.f32 0.0, %v276
        %v285 = vsub.f32 0.0, %v277
        %v286 = vmul.f32 %v278, 1.442695
        %v287 = vpow.pop %v286
        %v288 = vmul.f32 %v279, 1.442695
        %v289 = vpow.pop %v288
        %v290 = vmul.f32 %v280, 1.442695
        %v291 = vpow.pop %v290
        %v292 = vmul.f32 %v281, 1.442695
        %v293 = vpow.pop %v292
        %v294 = vmul.f32 %v282, 1.442695
        %v295 = vpow.pop %v294
        %v296 = vmul.f32 %v283, 1.442695
        %v297 = vpow.pop %v296
        %v298 = vmul.f32 %v284, 1.442695
        %v299 = vpow.pop %v298
        %v300 = vmul.f32 %v285, 1.442695
        %v301 = vpow.pop %v300
        %v302 = vadd.f32 %v287, 1.0
        %v303 = vlog2.pop %v302
        %v304 = vmul.f32 %v303, 0.6931472
        %v305 = vmul.f32 -0.5, %v287
        %v306 = vadd.f32 %v305, 1.0
        %v307 = vmul.f32 %v306, %v287
        %v308 = vand.u32 2147483647, %v287
        %vm309 = vcmp.lt.f32.partialorder %v308, 0.0004427343
        %v310 = vsel %vm309, %v307, %v304
        %v311 = vadd.f32 %v289, 1.0
        %v312 = vlog2.pop %v311
        %v313 = vmul.f32 %v312, 0.6931472
        %v314 = vmul.f32 -0.5, %v289
        %v315 = vadd.f32 %v314, 1.0
        %v316 = vmul.f32 %v315, %v289
        %v317 = vand.u32 2147483647, %v289
        %vm318 = vcmp.lt.f32.partialorder %v317, 0.0004427343
        %v319 = vsel %vm318, %v316, %v313
        %v320 = vadd.f32 %v291, 1.0
        %v321 = vlog2.pop %v320
        %v322 = vmul.f32 %v321, 0.6931472
        %v323 = vmul.f32 -0.5, %v291
        %v324 = vadd.f32 %v323, 1.0
        %v325 = vmul.f32 %v324, %v291
        %v326 = vand.u32 2147483647, %v291
        %vm327 = vcmp.lt.f32.partialorder %v326, 0.0004427343
        %v328 = vsel %vm327, %v325, %v322
        %v329 = vadd.f32 %v293, 1.0
        %v330 = vlog2.pop %v329
        %v331 = vmul.f32 %v330, 0.6931472
        %v332 = vmul.f32 -0.5, %v293
        %v333 = vadd.f32 %v332, 1.0
        %v334 = vmul.f32 %v333, %v293
        %v335 = vand.u32 2147483647, %v293
        %vm336 = vcmp.lt.f32.partialorder %v335, 0.0004427343
        %v337 = vsel %vm336, %v334, %v331
        %v338 = vadd.f32 %v295, 1.0
        %v339 = vlog2.pop %v338
        %v340 = vmul.f32 %v339, 0.6931472
        %v341 = vmul.f32 -0.5, %v295
        %v342 = vadd.f32 %v341, 1.0
        %v343 = vmul.f32 %v342, %v295
        %v344 = vand.u32 2147483647, %v295
        %vm345 = vcmp.lt.f32.partialorder %v344, 0.0004427343
        %v346 = vsel %vm345, %v343, %v340
        %v347 = vadd.f32 %v297, 1.0
        %v348 = vlog2.pop %v347
        %v349 = vmul.f32 %v348, 0.6931472
        %v350 = vmul.f32 -0.5, %v297
        %v351 = vadd.f32 %v350, 1.0
        %v352 = vmul.f32 %v351, %v297
        %v353 = vand.u32 2147483647, %v297
        %vm354 = vcmp.lt.f32.partialorder %v353, 0.0004427343
        %v355 = vsel %vm354, %v352, %v349
        %v356 = vadd.f32 %v299, 1.0
        %v357 = vlog2.pop %v356
        %v358 = vmul.f32 %v357, 0.6931472
        %v359 = vmul.f32 -0.5, %v299
        %v360 = vadd.f32 %v359, 1.0
        %v361 = vmul.f32 %v360, %v299
        %v362 = vand.u32 2147483647, %v299
        %vm363 = vcmp.lt.f32.partialorder %v362, 0.0004427343
        %v364 = vsel %vm363, %v361, %v358
        %v365 = vadd.f32 %v301, 1.0
        %v366 = vlog2.pop %v365
        %v367 = vmul.f32 %v366, 0.6931472
        %v368 = vmul.f32 -0.5, %v301
        %v369 = vadd.f32 %v368, 1.0
        %v370 = vmul.f32 %v369, %v301
        %v371 = vand.u32 2147483647, %v301
        %vm372 = vcmp.lt.f32.partialorder %v371, 0.0004427343
        %v373 = vsel %vm372, %v370, %v367
        %v374 = vadd.f32 %v262, %v310
        %v375 = vadd.f32 %v263, %v319
        %v376 = vadd.f32 %v264, %v328
        %v377 = vadd.f32 %v265, %v337
        %v378 = vadd.f32 %v266, %v346
        %v379 = vadd.f32 %v267, %v355
        %v380 = vadd.f32 %v268, %v364
        %v381 = vadd.f32 %v269, %v373
        %v382 = vmul.f32 %v238, 2.0
        %v383 = vmul.f32 %v239, 2.0
        %v384 = vmul.f32 %v240, 2.0
        %v385 = vmul.f32 %v241, 2.0
        %v386 = vmul.f32 %v242, 2.0
        %v387 = vmul.f32 %v243, 2.0
        %v388 = vmul.f32 %v244, 2.0
        %v389 = vmul.f32 %v245, 2.0
        %v390 = vsub.f32 1.0, %v382
        %v391 = vsub.f32 1.0, %v383
        %v392 = vsub.f32 1.0, %v384
        %v393 = vsub.f32 1.0, %v385
        %v394 = vsub.f32 1.0, %v386
        %v395 = vsub.f32 1.0, %v387
        %v396 = vsub.f32 1.0, %v388
        %v397 = vsub.f32 1.0, %v389
        %v398 = vmul.f32 %v230, %v390
        %v399 = vmul.f32 %v231, %v391
        %v400 = vmul.f32 %v232, %v392
        %v401 = vmul.f32 %v233, %v393
        %v402 = vmul.f32 %v234, %v394
        %v403 = vmul.f32 %v235, %v395
        %v404 = vmul.f32 %v236, %v396
        %v405 = vmul.f32 %v237, %v397
        %v406 = vsub.f32 0.0, %v398
        %v407 = vsub.f32 0.0, %v399
        %v408 = vsub.f32 0.0, %v400
        %v409 = vsub.f32 0.0, %v401
        %v410 = vsub.f32 0.0, %v402
        %v411 = vsub.f32 0.0, %v403
        %v412 = vsub.f32 0.0, %v404
        %v413 = vsub.f32 0.0, %v405
        %v414 = vmul.f32 %v406, 1.442695
        %v415 = vpow.pop %v414
        %v416 = vmul.f32 %v407, 1.442695
        %v417 = vpow.pop %v416
        %v418 = vmul.f32 %v408, 1.442695
        %v419 = vpow.pop %v418
        %v420 = vmul.f32 %v409, 1.442695
        %v421 = vpow.pop %v420
        %v422 = vmul.f32 %v410, 1.442695
        %v423 = vpow.pop %v422
        %v424 = vmul.f32 %v411, 1.442695
        %v425 = vpow.pop %v424
        %v426 = vmul.f32 %v412, 1.442695
        %v427 = vpow.pop %v426
        %v428 = vmul.f32 %v413, 1.442695
        %v429 = vpow.pop %v428
        %v430 = vadd.f32 %v415, 1.0
        %v431 = vadd.f32 %v417, 1.0
        %v432 = vadd.f32 %v419, 1.0
        %v433 = vadd.f32 %v421, 1.0
        %v434 = vadd.f32 %v423, 1.0
        %v435 = vadd.f32 %v425, 1.0
        %v436 = vadd.f32 %v427, 1.0
        %v437 = vadd.f32 %v429, 1.0
        %v438 = vrcp.pop %v430
        %v439 = vmul.f32 1.0, %v438
        %v440 = vrcp.pop %v431
        %v441 = vmul.f32 1.0, %v440
        %v442 = vrcp.pop %v432
        %v443 = vmul.f32 1.0, %v442
        %v444 = vrcp.pop %v433
        %v445 = vmul.f32 1.0, %v444
        %v446 = vrcp.pop %v434
        %v447 = vmul.f32 1.0, %v446
        %v448 = vrcp.pop %v435
        %v449 = vmul.f32 1.0, %v448
        %v450 = vrcp.pop %v436
        %v451 = vmul.f32 1.0, %v450
        %v452 = vrcp.pop %v437
        %v453 = vmul.f32 1.0, %v452
        %v454 = vmul.f32 %v439, %v439
        %v455 = vmul.f32 %v441, %v441
        %v456 = vmul.f32 %v443, %v443
        %v457 = vmul.f32 %v445, %v445
        %v458 = vmul.f32 %v447, %v447
        %v459 = vmul.f32 %v449, %v449
        %v460 = vmul.f32 %v451, %v451
        %v461 = vmul.f32 %v453, %v453
        %v462 = vmul.f32 %v454, %v374
        %v463 = vmul.f32 %v455, %v375
        %v464 = vmul.f32 %v456, %v376
        %v465 = vmul.f32 %v457, %v377
        %v466 = vmul.f32 %v458, %v378
        %v467 = vmul.f32 %v459, %v379
        %v468 = vmul.f32 %v460, %v380
        %v469 = vmul.f32 %v461, %v381
        %s470 = sadd.s32 %s26, %s27
        %v471 = vlaneseq
        %v472 = vshrl.u32 %v471, 7
        %v473 = vlaneseq
        %v474 = vand.u32 %v473, 127
        %v475 = vadd.s32 %v474, 128
        %v476 = vadd.s32 %v474, 256
        %v477 = vadd.s32 %v474, 384
        %v478 = vadd.s32 %v474, 512
        %v479 = vadd.s32 %v474, 640
        %v480 = vadd.s32 %v474, 768
        %v481 = vadd.s32 %v474, 896
        %s482 = smul.u32 %s470, 8
        %v483 = vstv %s482
        %v484 = vadd.s32 %v483, %v472
        %v485 = vmul.u32 %v484, 1024
        %v486 = vadd.s32 %v485, %v474
        %v487 = vadd.s32 %v485, %v475
        %v488 = vadd.s32 %v485, %v476
        %v489 = vadd.s32 %v485, %v477
        %v490 = vadd.s32 %v485, %v478
        %v491 = vadd.s32 %v485, %v479
        %v492 = vadd.s32 %v485, %v480
        %v493 = vadd.s32 %v485, %v481
        %vm494 = vcmp.lt.s32.totalorder %v486, 2048
        %vm495 = vcmp.lt.s32.totalorder %v487, 2048
        %vm496 = vcmp.lt.s32.totalorder %v488, 2048
        %vm497 = vcmp.lt.s32.totalorder %v489, 2048
        %vm498 = vcmp.lt.s32.totalorder %v490, 2048
        %vm499 = vcmp.lt.s32.totalorder %v491, 2048
        %vm500 = vcmp.lt.s32.totalorder %v492, 2048
        %vm501 = vcmp.lt.s32.totalorder %v493, 2048
        %v502 = vsel %vm494, %v462, 0.0
        %v503 = vsel %vm495, %v463, 0.0
        %v504 = vsel %vm496, %v464, 0.0
        %v505 = vsel %vm497, %v465, 0.0
        %v506 = vsel %vm498, %v466, 0.0
        %v507 = vsel %vm499, %v467, 0.0
        %v508 = vsel %vm500, %v468, 0.0
        %v509 = vsel %vm501, %v469, 0.0
        %v510 = vadd.f32 %v502, 0.0
        %v511 = vadd.f32 %v503, 0.0
        %v512 = vadd.f32 %v504, 0.0
        %v513 = vadd.f32 %v505, 0.0
        %v514 = vadd.f32 %v506, 0.0
        %v515 = vadd.f32 %v507, 0.0
        %v516 = vadd.f32 %v508, 0.0
        %v517 = vadd.f32 %v509, 0.0
        %v518 = vld [vmem:[%s215] sm:$0xff]
        %v519 = vld [vmem:[%s215 + $0x8] sm:$0xff]
        %v520 = vld [vmem:[%s215 + $0x10] sm:$0xff]
        %v521 = vld [vmem:[%s215 + $0x18] sm:$0xff]
        %v522 = vld [vmem:[%s215 + $0x20] sm:$0xff]
        %v523 = vld [vmem:[%s215 + $0x28] sm:$0xff]
        %v524 = vld [vmem:[%s215 + $0x30] sm:$0xff]
        %v525 = vld [vmem:[%s215 + $0x38] sm:$0xff]
        %v526 = vadd.f32 %v518, %v510
        %v527 = vadd.f32 %v519, %v511
        %v528 = vadd.f32 %v520, %v512
        %v529 = vadd.f32 %v521, %v513
        %v530 = vadd.f32 %v522, %v514
        %v531 = vadd.f32 %v523, %v515
        %v532 = vadd.f32 %v524, %v516
        %v533 = vadd.f32 %v525, %v517
        %534 = vst [vmem:[%s215] sm:$0xff] %v526
        %535 = vst [vmem:[%s215 + $0x8] sm:$0xff] %v527
        %536 = vst [vmem:[%s215 + $0x10] sm:$0xff] %v528
        %537 = vst [vmem:[%s215 + $0x18] sm:$0xff] %v529
        %538 = vst [vmem:[%s215 + $0x20] sm:$0xff] %v530
        %539 = vst [vmem:[%s215 + $0x28] sm:$0xff] %v531
        %540 = vst [vmem:[%s215 + $0x30] sm:$0xff] %v532
        %541 = vst [vmem:[%s215 + $0x38] sm:$0xff] %v533
        %s542 = sand.u32 %s98, 1
        %s543 = scalar_lea.sflag [#allocation4], %s542
        %s544 = sand.u32 %s98, 1
        %s545 = smul.addr %s544, 64
        %s546 = scalar_lea.vmem [#allocation7], %s545
        // Predicated region
        $region41: #{tpu_custom_call.1} parent=27 // pred_check
          %p547 = pneg %p108
        $region42: #{tpu_custom_call.1} parent=27 // pred_check_branch
          %549 = sbr.rel (%p547) target = $region44
        $region43: #{tpu_custom_call.1} parent=27 // pred_region
          %s551 = ssub.s32 1024, 1024
          %552 = vsyncadd %s543, %s551
          %s553 = smul.addr %s26, 8
          %s554 = smul.addr %s553, 128
          %s555 = scalar_lea.hbm %s2, %s554
          %s557 = sshll.u32 %s546, 4
          %s558 = int_to_ptr.vmem [resolvable:$true] %s557
          %560 = dma.vmem_to_hbm [thread:$0]  %s558, 1024, %s555, %s543
        $region44: #{tpu_custom_call.1} parent=27 // pred_fallthru
          _
      $region28: #{tpu_custom_call.1} parent=5 // pred_fallthru
        _
      %p561 = scmp.le.s32.totalorder 2, %s17
      // Predicated region
      $region45: #{tpu_custom_call.1} parent=5 // pred_check
        %p562 = pneg %p561
      $region46: #{tpu_custom_call.1} parent=5 // pred_check_branch
        %564 = sbr.rel (%p562) target = $region48
      $region47: #{tpu_custom_call.1} parent=5 // pred_region
        %s565 = ssub.s32 %s17, 2
        // Predicated region
        $region49: #{tpu_custom_call.1} parent=47 // pred_check
          %p566 = pneg %p114
        $region50: #{tpu_custom_call.1} parent=47 // pred_check_branch
          %568 = sbr.rel (%p566) target = $region52
        $region51: #{tpu_custom_call.1} parent=47 // pred_region
          %s569 = sand.u32 %s99, 1
          %s570 = scalar_lea.sflag [#allocation4], %s569
          %s571 = sand.u32 %s99, 1
          %s572 = smul.addr %s571, 64
          %s573 = scalar_lea.vmem [#allocation7], %s572
          %574 = dma.done %s570, 1024
        $region52: #{tpu_custom_call.1} parent=47 // pred_fallthru
          _
      $region48: #{tpu_custom_call.1} parent=5 // pred_fallthru
        _
    $region6: #{tpu_custom_call.1} parent=1 // loop_footer
      %s21 = sadd.s32 1, %s17
    $region7: #{tpu_custom_call.1} parent=1 // loop_footer_branch
      %16 = sbr.rel target = $region3
    $region8: #{tpu_custom_call.1} parent=1 // loop_exit
      _
    %575 = vsyncpa [#allocation3], 1
    %s576 = scalar_lea.sflag [#allocation3], 1
    %577 = vsyncpa %s576, 1
    %578 = vsyncpa [#allocation6], 1
    %s579 = scalar_lea.sflag [#allocation6], 1
    %580 = vsyncpa %s579, 1
    %581 = vsyncpa [#allocation4], 1
    %s582 = scalar_lea.sflag [#allocation4], 1
    %583 = vsyncpa %s582, 1

</llo_original>
